<compile_context>
chip_gen: v5e
topology: v5e:2x2
jax: 0.10.0
libtpu: 0.0.40
codegen_flags: <defaults>
</compile_context>

<pallas_src>
import jax
import jax.numpy as jnp
from jax.experimental import pallas as pl
from jax.experimental.pallas import tpu as pltpu

FEATURES = 28 * 28          # 784
FEATURES_PAD = 896          # 7 * 128, lane-dense padding of the 784 dim


def _autoencoder_kernel(x_ref,
                        w1, b1, w2, b2, w3, b3,      # encoder (784p->128->64->12)
                        w45, b45,                    # fused latent (12->3->12)
                        w6, b6, w7, b7, w8, b8,      # decoder (12->64->128->784p)
                        o_ref):
    """Full forward for one batch tile: 7 matmuls (bf16 in, f32 acc), ReLU/Tanh."""

    def linear(h, w_ref, b_ref):
        return jnp.dot(h.astype(jnp.bfloat16), w_ref[...],
                       preferred_element_type=jnp.float32) + b_ref[...]

    h = x_ref[...]                                  # (TB, 896) bf16
    h = jnp.maximum(linear(h, w1, b1), 0.0)         # 896 -> 128
    h = jnp.maximum(linear(h, w2, b2), 0.0)         # 128 -> 64
    h = jnp.maximum(linear(h, w3, b3), 0.0)         # 64  -> 12
    h = jnp.maximum(linear(h, w45, b45), 0.0)       # 12 -> 3 -> 12 (fused, exact)
    h = jnp.maximum(linear(h, w6, b6), 0.0)         # 12  -> 64
    h = jnp.maximum(linear(h, w7, b7), 0.0)         # 64  -> 128
    h = jnp.tanh(linear(h, w8, b8))                 # 128 -> 896 (padded cols -> 0)
    o_ref[...] = h.astype(o_ref.dtype)


# ---------------------------------------------------------------------------
# Parameter construction / preparation
# ---------------------------------------------------------------------------

def init_params(key):
    """nn.Linear-style init U(-1/sqrt(fan_in), 1/sqrt(fan_in)); weights (in,out), biases (1,out)."""
    dims = [(784, 128), (128, 64), (64, 12), (12, 3),      # encoder
            (3, 12), (12, 64), (64, 128), (128, 784)]      # decoder
    params = []
    for (fan_in, fan_out) in dims:
        key, kw, kb = jax.random.split(key, 3)
        bound = 1.0 / jnp.sqrt(jnp.float32(fan_in))
        params.append(jax.random.uniform(kw, (fan_in, fan_out), jnp.float32, -bound, bound))
        params.append(jax.random.uniform(kb, (1, fan_out), jnp.float32, -bound, bound))
    return params


def prepare_params(params_f32):
    """Fuse the latent pair, pad 784->896, cast weights to bf16 (biases stay f32)."""
    (w1, b1, w2, b2, w3, b3, w4, b4,
     w5, b5, w6, b6, w7, b7, w8, b8) = params_f32

    # Fuse Linear(12->3) and Linear(3->12): no activation in between.
    w45 = w4 @ w5                      # (12, 12)
    b45 = b4 @ w5 + b5                 # (1, 12)

    pad = FEATURES_PAD - FEATURES
    w1p = jnp.pad(w1, ((0, pad), (0, 0)))        # extra K rows are zero
    w8p = jnp.pad(w8, ((0, 0), (0, pad)))        # extra N cols are zero
    b8p = jnp.pad(b8, ((0, 0), (0, pad)))

    bf = lambda a: a.astype(jnp.bfloat16)
    weights = [bf(w1p), bf(w2), bf(w3), bf(w45), bf(w6), bf(w7), bf(w8p)]
    biases = [b1, b2, b3, b45, b6, b7, b8p]      # f32
    prep = []
    for w, b in zip(weights, biases):
        prep.append(w)
        prep.append(b)
    return tuple(prep)


# ---------------------------------------------------------------------------
# Wrapper
# ---------------------------------------------------------------------------

def _round_up(n, m):
    return ((n + m - 1) // m) * m


@jax.jit
def autoencoder_forward(x, prep):
    B, F = x.shape
    assert F == FEATURES, F

    # Batch tile: >=16 rows (bf16 sublane packing); 256-row tiles for big batches.
    B16 = max(16, _round_up(B, 16))
    if B16 >= 256:
        TB = 256
        B_pad = _round_up(B, TB)
    else:
        TB = B16
        B_pad = B16

    x_pad = jnp.pad(x, ((0, B_pad - B), (0, FEATURES_PAD - FEATURES))).astype(jnp.bfloat16)

    io_spec = pl.BlockSpec((TB, FEATURES_PAD), lambda i: (i, 0))
    # Weights/biases: full-array block, constant index_map -> resident in VMEM
    # across the whole batch grid (no re-DMA per step).
    in_specs = [io_spec] + [pl.BlockSpec(p.shape, lambda i: (0, 0)) for p in prep]

    out = pl.pallas_call(
        _autoencoder_kernel,
        out_shape=jax.ShapeDtypeStruct((B_pad, FEATURES_PAD), jnp.float32),
        grid=(B_pad // TB,),
        in_specs=in_specs,
        out_specs=io_spec,
        compiler_params=pltpu.CompilerParams(
            dimension_semantics=("parallel",)),   # shards batch tiles over v7x's 2 TCs
    )(x_pad, *prep)

    return out[:B, :FEATURES]


# ---------------------------------------------------------------------------
# References
# ---------------------------------------------------------------------------

def reference_forward_f32(x, params_f32):
    """Original (unfused, f32) AutoEncoder forward."""
    (w1, b1, w2, b2, w3, b3, w4, b4,
     w5, b5, w6, b6, w7, b7, w8, b8) = params_f32
    h = x
    h = jnp.maximum(h @ w1 + b1, 0.0)
    h = jnp.maximum(h @ w2 + b2, 0.0)
    h = jnp.maximum(h @ w3 + b3, 0.0)
    h = h @ w4 + b4
    h = jnp.maximum(h @ w5 + b5, 0.0)
    h = jnp.maximum(h @ w6 + b6, 0.0)
    h = jnp.maximum(h @ w7 + b7, 0.0)
    return jnp.tanh(h @ w8 + b8)


def reference_forward_prepared(x_pad_bf16, prep):
    """Pure-JAX version of exactly what the kernel computes (bf16 / fused / padded)."""
    (w1, b1, w2, b2, w3, b3, w45, b45, w6, b6, w7, b7, w8, b8) = prep

    def lin(h, w, b):
        return jnp.dot(h.astype(jnp.bfloat16), w,
                       preferred_element_type=jnp.float32) + b

    h = x_pad_bf16
    h = jnp.maximum(lin(h, w1, b1), 0.0)
    h = jnp.maximum(lin(h, w2, b2), 0.0)
    h = jnp.maximum(lin(h, w3, b3), 0.0)
    h = jnp.maximum(lin(h, w45, b45), 0.0)
    h = jnp.maximum(lin(h, w6, b6), 0.0)
    h = jnp.maximum(lin(h, w7, b7), 0.0)
    return jnp.tanh(lin(h, w8, b8))


if __name__ == "__main__":
    key = jax.random.PRNGKey(0)
    key, kx = jax.random.split(key)

    batch = 8
    x = jax.random.normal(kx, (batch, FEATURES), jnp.float32)

    params = init_params(key)
    prep = prepare_params(params)

    out = jax.block_until_ready(autoencoder_forward(x, prep))
    assert out.shape == (batch, FEATURES), out.shape

    # Tight check against a matching bf16/fused reference (same math as the kernel).
    b_pad = 16
    x_pad = jnp.pad(x, ((0, b_pad - batch), (0, FEATURES_PAD - FEATURES))).astype(jnp.bfloat16)
    ref_match = reference_forward_prepared(x_pad, prep)[:batch, :FEATURES]
    assert jnp.allclose(out, ref_match, atol=1e-2, rtol=0.0), (
        float(jnp.max(jnp.abs(out - ref_match))))

    # Loose sanity check against the original f32 module semantics (bf16 rounding only).
    ref_f32 = reference_forward_f32(x, params)
    assert jnp.allclose(out, ref_f32, atol=8e-2, rtol=0.0), (
        float(jnp.max(jnp.abs(out - ref_f32))))

    print("KERNEL_OK")
</pallas_src>

<mosaic_0001>
module attributes {stable_mosaic.version = 11 : i64} {
  func.func @_autoencoder_kernel(%arg0: i32, %arg1: memref<16x896xbf16, #tpu.memory_space<vmem>>, %arg2: memref<896x128xbf16, #tpu.memory_space<vmem>>, %arg3: memref<1x128xf32, #tpu.memory_space<vmem>>, %arg4: memref<128x64xbf16, #tpu.memory_space<vmem>>, %arg5: memref<1x64xf32, #tpu.memory_space<vmem>>, %arg6: memref<64x12xbf16, #tpu.memory_space<vmem>>, %arg7: memref<1x12xf32, #tpu.memory_space<vmem>>, %arg8: memref<12x12xbf16, #tpu.memory_space<vmem>>, %arg9: memref<1x12xf32, #tpu.memory_space<vmem>>, %arg10: memref<12x64xbf16, #tpu.memory_space<vmem>>, %arg11: memref<1x64xf32, #tpu.memory_space<vmem>>, %arg12: memref<64x128xbf16, #tpu.memory_space<vmem>>, %arg13: memref<1x128xf32, #tpu.memory_space<vmem>>, %arg14: memref<128x896xbf16, #tpu.memory_space<vmem>>, %arg15: memref<1x896xf32, #tpu.memory_space<vmem>>, %arg16: memref<16x896xf32, #tpu.memory_space<vmem>>) attributes {dimension_semantics = [#tpu.dimension_semantics<parallel>], iteration_bounds = array<i64: 1>, scalar_prefetch = 0 : i64, scratch_operands = 0 : i64, tpu.core_type = #tpu.core_type<tc>, window_params = [{transform_indices = @transform_0, window_bounds = array<i64: 16, 896>}, {pipeline_mode = #tpu.pipeline_mode<synchronous>, transform_indices = @transform_1, window_bounds = array<i64: 896, 128>}, {pipeline_mode = #tpu.pipeline_mode<synchronous>, transform_indices = @transform_2, window_bounds = array<i64: 1, 128>}, {pipeline_mode = #tpu.pipeline_mode<synchronous>, transform_indices = @transform_3, window_bounds = array<i64: 128, 64>}, {pipeline_mode = #tpu.pipeline_mode<synchronous>, transform_indices = @transform_4, window_bounds = array<i64: 1, 64>}, {pipeline_mode = #tpu.pipeline_mode<synchronous>, transform_indices = @transform_5, window_bounds = array<i64: 64, 12>}, {pipeline_mode = #tpu.pipeline_mode<synchronous>, transform_indices = @transform_6, window_bounds = array<i64: 1, 12>}, {pipeline_mode = #tpu.pipeline_mode<synchronous>, transform_indices = @transform_7, window_bounds = array<i64: 12, 12>}, {pipeline_mode = #tpu.pipeline_mode<synchronous>, transform_indices = @transform_8, window_bounds = array<i64: 1, 12>}, {pipeline_mode = #tpu.pipeline_mode<synchronous>, transform_indices = @transform_9, window_bounds = array<i64: 12, 64>}, {pipeline_mode = #tpu.pipeline_mode<synchronous>, transform_indices = @transform_10, window_bounds = array<i64: 1, 64>}, {pipeline_mode = #tpu.pipeline_mode<synchronous>, transform_indices = @transform_11, window_bounds = array<i64: 64, 128>}, {pipeline_mode = #tpu.pipeline_mode<synchronous>, transform_indices = @transform_12, window_bounds = array<i64: 1, 128>}, {pipeline_mode = #tpu.pipeline_mode<synchronous>, transform_indices = @transform_13, window_bounds = array<i64: 128, 896>}, {pipeline_mode = #tpu.pipeline_mode<synchronous>, transform_indices = @transform_14, window_bounds = array<i64: 1, 896>}, {transform_indices = @transform_15, window_bounds = array<i64: 16, 896>}]} {
    %c0 = arith.constant 0 : index
    %c0_0 = arith.constant 0 : index
    %0 = vector.load %arg1[%c0, %c0_0] : memref<16x896xbf16, #tpu.memory_space<vmem>>, vector<16x896xbf16>
    %c0_1 = arith.constant 0 : index
    %c0_2 = arith.constant 0 : index
    %1 = vector.load %arg2[%c0_1, %c0_2] : memref<896x128xbf16, #tpu.memory_space<vmem>>, vector<896x128xbf16>
    %cst = arith.constant dense<0.000000e+00> : vector<16x128xf32>
    %2 = tpu.matmul %0, %1, %cst {dimension_numbers = #tpu.dot_dimension_numbers<[1], [0], [0], [1], [0, 0, 1, 1], [], []>} : vector<16x896xbf16>, vector<896x128xbf16>, vector<16x128xf32> -> vector<16x128xf32>
    %c0_3 = arith.constant 0 : index
    %c0_4 = arith.constant 0 : index
    %3 = vector.load %arg3[%c0_3, %c0_4] : memref<1x128xf32, #tpu.memory_space<vmem>>, vector<1x128xf32>
    %4 = vector.broadcast %3 : vector<1x128xf32> to vector<16x128xf32>
    %5 = arith.addf %2, %4 : vector<16x128xf32>
    %cst_5 = arith.constant 0.000000e+00 : f32
    %6 = vector.broadcast %cst_5 : f32 to vector<16x128xf32>
    %7 = arith.maximumf %5, %6 : vector<16x128xf32>
    %8 = arith.truncf %7 : vector<16x128xf32> to vector<16x128xbf16>
    %c0_6 = arith.constant 0 : index
    %c0_7 = arith.constant 0 : index
    %9 = vector.load %arg4[%c0_6, %c0_7] : memref<128x64xbf16, #tpu.memory_space<vmem>>, vector<128x64xbf16>
    %cst_8 = arith.constant dense<0.000000e+00> : vector<16x64xf32>
    %10 = tpu.matmul %8, %9, %cst_8 {dimension_numbers = #tpu.dot_dimension_numbers<[1], [0], [0], [1], [0, 0, 1, 1], [], []>} : vector<16x128xbf16>, vector<128x64xbf16>, vector<16x64xf32> -> vector<16x64xf32>
    %c0_9 = arith.constant 0 : index
    %c0_10 = arith.constant 0 : index
    %11 = vector.load %arg5[%c0_9, %c0_10] : memref<1x64xf32, #tpu.memory_space<vmem>>, vector<1x64xf32>
    %12 = vector.broadcast %11 : vector<1x64xf32> to vector<16x64xf32>
    %13 = arith.addf %10, %12 : vector<16x64xf32>
    %cst_11 = arith.constant 0.000000e+00 : f32
    %14 = vector.broadcast %cst_11 : f32 to vector<16x64xf32>
    %15 = arith.maximumf %13, %14 : vector<16x64xf32>
    %16 = arith.truncf %15 : vector<16x64xf32> to vector<16x64xbf16>
    %c0_12 = arith.constant 0 : index
    %c0_13 = arith.constant 0 : index
    %17 = vector.load %arg6[%c0_12, %c0_13] : memref<64x12xbf16, #tpu.memory_space<vmem>>, vector<64x12xbf16>
    %cst_14 = arith.constant dense<0.000000e+00> : vector<16x12xf32>
    %18 = tpu.matmul %16, %17, %cst_14 {dimension_numbers = #tpu.dot_dimension_numbers<[1], [0], [0], [1], [0, 0, 1, 1], [], []>} : vector<16x64xbf16>, vector<64x12xbf16>, vector<16x12xf32> -> vector<16x12xf32>
    %c0_15 = arith.constant 0 : index
    %c0_16 = arith.constant 0 : index
    %19 = vector.load %arg7[%c0_15, %c0_16] : memref<1x12xf32, #tpu.memory_space<vmem>>, vector<1x12xf32>
    %20 = vector.broadcast %19 : vector<1x12xf32> to vector<16x12xf32>
    %21 = arith.addf %18, %20 : vector<16x12xf32>
    %cst_17 = arith.constant 0.000000e+00 : f32
    %22 = vector.broadcast %cst_17 : f32 to vector<16x12xf32>
    %23 = arith.maximumf %21, %22 : vector<16x12xf32>
    %24 = arith.truncf %23 : vector<16x12xf32> to vector<16x12xbf16>
    %c0_18 = arith.constant 0 : index
    %c0_19 = arith.constant 0 : index
    %25 = vector.load %arg8[%c0_18, %c0_19] : memref<12x12xbf16, #tpu.memory_space<vmem>>, vector<12x12xbf16>
    %cst_20 = arith.constant dense<0.000000e+00> : vector<16x12xf32>
    %26 = tpu.matmul %24, %25, %cst_20 {dimension_numbers = #tpu.dot_dimension_numbers<[1], [0], [0], [1], [0, 0, 1, 1], [], []>} : vector<16x12xbf16>, vector<12x12xbf16>, vector<16x12xf32> -> vector<16x12xf32>
    %c0_21 = arith.constant 0 : index
    %c0_22 = arith.constant 0 : index
    %27 = vector.load %arg9[%c0_21, %c0_22] : memref<1x12xf32, #tpu.memory_space<vmem>>, vector<1x12xf32>
    %28 = vector.broadcast %27 : vector<1x12xf32> to vector<16x12xf32>
    %29 = arith.addf %26, %28 : vector<16x12xf32>
    %cst_23 = arith.constant 0.000000e+00 : f32
    %30 = vector.broadcast %cst_23 : f32 to vector<16x12xf32>
    %31 = arith.maximumf %29, %30 : vector<16x12xf32>
    %32 = arith.truncf %31 : vector<16x12xf32> to vector<16x12xbf16>
    %c0_24 = arith.constant 0 : index
    %c0_25 = arith.constant 0 : index
    %33 = vector.load %arg10[%c0_24, %c0_25] : memref<12x64xbf16, #tpu.memory_space<vmem>>, vector<12x64xbf16>
    %cst_26 = arith.constant dense<0.000000e+00> : vector<16x64xf32>
    %34 = tpu.matmul %32, %33, %cst_26 {dimension_numbers = #tpu.dot_dimension_numbers<[1], [0], [0], [1], [0, 0, 1, 1], [], []>} : vector<16x12xbf16>, vector<12x64xbf16>, vector<16x64xf32> -> vector<16x64xf32>
    %c0_27 = arith.constant 0 : index
    %c0_28 = arith.constant 0 : index
    %35 = vector.load %arg11[%c0_27, %c0_28] : memref<1x64xf32, #tpu.memory_space<vmem>>, vector<1x64xf32>
    %36 = vector.broadcast %35 : vector<1x64xf32> to vector<16x64xf32>
    %37 = arith.addf %34, %36 : vector<16x64xf32>
    %cst_29 = arith.constant 0.000000e+00 : f32
    %38 = vector.broadcast %cst_29 : f32 to vector<16x64xf32>
    %39 = arith.maximumf %37, %38 : vector<16x64xf32>
    %40 = arith.truncf %39 : vector<16x64xf32> to vector<16x64xbf16>
    %c0_30 = arith.constant 0 : index
    %c0_31 = arith.constant 0 : index
    %41 = vector.load %arg12[%c0_30, %c0_31] : memref<64x128xbf16, #tpu.memory_space<vmem>>, vector<64x128xbf16>
    %cst_32 = arith.constant dense<0.000000e+00> : vector<16x128xf32>
    %42 = tpu.matmul %40, %41, %cst_32 {dimension_numbers = #tpu.dot_dimension_numbers<[1], [0], [0], [1], [0, 0, 1, 1], [], []>} : vector<16x64xbf16>, vector<64x128xbf16>, vector<16x128xf32> -> vector<16x128xf32>
    %c0_33 = arith.constant 0 : index
    %c0_34 = arith.constant 0 : index
    %43 = vector.load %arg13[%c0_33, %c0_34] : memref<1x128xf32, #tpu.memory_space<vmem>>, vector<1x128xf32>
    %44 = vector.broadcast %43 : vector<1x128xf32> to vector<16x128xf32>
    %45 = arith.addf %42, %44 : vector<16x128xf32>
    %cst_35 = arith.constant 0.000000e+00 : f32
    %46 = vector.broadcast %cst_35 : f32 to vector<16x128xf32>
    %47 = arith.maximumf %45, %46 : vector<16x128xf32>
    %48 = arith.truncf %47 : vector<16x128xf32> to vector<16x128xbf16>
    %c0_36 = arith.constant 0 : index
    %c0_37 = arith.constant 0 : index
    %49 = vector.load %arg14[%c0_36, %c0_37] : memref<128x896xbf16, #tpu.memory_space<vmem>>, vector<128x896xbf16>
    %cst_38 = arith.constant dense<0.000000e+00> : vector<16x896xf32>
    %50 = tpu.matmul %48, %49, %cst_38 {dimension_numbers = #tpu.dot_dimension_numbers<[1], [0], [0], [1], [0, 0, 1, 1], [], []>} : vector<16x128xbf16>, vector<128x896xbf16>, vector<16x896xf32> -> vector<16x896xf32>
    %c0_39 = arith.constant 0 : index
    %c0_40 = arith.constant 0 : index
    %51 = vector.load %arg15[%c0_39, %c0_40] : memref<1x896xf32, #tpu.memory_space<vmem>>, vector<1x896xf32>
    %52 = vector.broadcast %51 : vector<1x896xf32> to vector<16x896xf32>
    %53 = arith.addf %50, %52 : vector<16x896xf32>
    %54 = math.tanh %53 : vector<16x896xf32>
    %c0_41 = arith.constant 0 : index
    %c0_42 = arith.constant 0 : index
    %55 = vector.load %arg16[%c0_41, %c0_42] : memref<16x896xf32, #tpu.memory_space<vmem>>, vector<16x896xf32>
    tpu.vector_store %arg16[%c0_41, %c0_42], %54 {strides = array<i32>} : memref<16x896xf32, #tpu.memory_space<vmem>>, vector<16x896xf32>,
    return
  }
  func.func @transform_0(%arg0: i32) -> (i32, i32) {
    %c0_i32 = arith.constant 0 : i32
    %c0_i32_0 = arith.constant 0 : i32
    return %arg0, %c0_i32 : i32, i32
  }
  func.func @transform_1(%arg0: i32) -> (i32, i32) {
    %c0_i32 = arith.constant 0 : i32
    %c0_i32_0 = arith.constant 0 : i32
    %c0_i32_1 = arith.constant 0 : i32
    return %c0_i32, %c0_i32_0 : i32, i32
  }
  func.func @transform_2(%arg0: i32) -> (i32, i32) {
    %c0_i32 = arith.constant 0 : i32
    %c0_i32_0 = arith.constant 0 : i32
    %c0_i32_1 = arith.constant 0 : i32
    return %c0_i32, %c0_i32_0 : i32, i32
  }
  func.func @transform_3(%arg0: i32) -> (i32, i32) {
    %c0_i32 = arith.constant 0 : i32
    %c0_i32_0 = arith.constant 0 : i32
    %c0_i32_1 = arith.constant 0 : i32
    return %c0_i32, %c0_i32_0 : i32, i32
  }
  func.func @transform_4(%arg0: i32) -> (i32, i32) {
    %c0_i32 = arith.constant 0 : i32
    %c0_i32_0 = arith.constant 0 : i32
    %c0_i32_1 = arith.constant 0 : i32
    return %c0_i32, %c0_i32_0 : i32, i32
  }
  func.func @transform_5(%arg0: i32) -> (i32, i32) {
    %c0_i32 = arith.constant 0 : i32
    %c0_i32_0 = arith.constant 0 : i32
    %c0_i32_1 = arith.constant 0 : i32
    return %c0_i32, %c0_i32_0 : i32, i32
  }
  func.func @transform_6(%arg0: i32) -> (i32, i32) {
    %c0_i32 = arith.constant 0 : i32
    %c0_i32_0 = arith.constant 0 : i32
    %c0_i32_1 = arith.constant 0 : i32
    return %c0_i32, %c0_i32_0 : i32, i32
  }
  func.func @transform_7(%arg0: i32) -> (i32, i32) {
    %c0_i32 = arith.constant 0 : i32
    %c0_i32_0 = arith.constant 0 : i32
    %c0_i32_1 = arith.constant 0 : i32
    return %c0_i32, %c0_i32_0 : i32, i32
  }
  func.func @transform_8(%arg0: i32) -> (i32, i32) {
    %c0_i32 = arith.constant 0 : i32
    %c0_i32_0 = arith.constant 0 : i32
    %c0_i32_1 = arith.constant 0 : i32
    return %c0_i32, %c0_i32_0 : i32, i32
  }
  func.func @transform_9(%arg0: i32) -> (i32, i32) {
    %c0_i32 = arith.constant 0 : i32
    %c0_i32_0 = arith.constant 0 : i32
    %c0_i32_1 = arith.constant 0 : i32
    return %c0_i32, %c0_i32_0 : i32, i32
  }
  func.func @transform_10(%arg0: i32) -> (i32, i32) {
    %c0_i32 = arith.constant 0 : i32
    %c0_i32_0 = arith.constant 0 : i32
    %c0_i32_1 = arith.constant 0 : i32
    return %c0_i32, %c0_i32_0 : i32, i32
  }
  func.func @transform_11(%arg0: i32) -> (i32, i32) {
    %c0_i32 = arith.constant 0 : i32
    %c0_i32_0 = arith.constant 0 : i32
    %c0_i32_1 = arith.constant 0 : i32
    return %c0_i32, %c0_i32_0 : i32, i32
  }
  func.func @transform_12(%arg0: i32) -> (i32, i32) {
    %c0_i32 = arith.constant 0 : i32
    %c0_i32_0 = arith.constant 0 : i32
    %c0_i32_1 = arith.constant 0 : i32
    return %c0_i32, %c0_i32_0 : i32, i32
  }
  func.func @transform_13(%arg0: i32) -> (i32, i32) {
    %c0_i32 = arith.constant 0 : i32
    %c0_i32_0 = arith.constant 0 : i32
    %c0_i32_1 = arith.constant 0 : i32
    return %c0_i32, %c0_i32_0 : i32, i32
  }
  func.func @transform_14(%arg0: i32) -> (i32, i32) {
    %c0_i32 = arith.constant 0 : i32
    %c0_i32_0 = arith.constant 0 : i32
    %c0_i32_1 = arith.constant 0 : i32
    return %c0_i32, %c0_i32_0 : i32, i32
  }
  func.func @transform_15(%arg0: i32) -> (i32, i32) {
    %c0_i32 = arith.constant 0 : i32
    %c0_i32_0 = arith.constant 0 : i32
    return %arg0, %c0_i32 : i32, i32
  }
}

</mosaic_0001>

<llo_original>
// kernel: autoencoder_forward.1
$region0: #{autoencoder_forward.1}
  #allocation0 [shape = 'u32[]', space=smem, size = 0x4, offset = 0x4, fixed_abs, tag = 'smem constant byte address 0x4 - core index']
  #allocation1 [shape = 'u32[72,128]{1,0:T(1,128)}', space=vmem, size = 0x9000, scoped, tag = 'internal scratch']
  %s0 = inlined_call_operand.vmem [shape: bf16[16,896], index: 0, kind: input, shape index: {}]
  %s1 = inlined_call_operand.hbm [shape: bf16[896,128], index: 1, kind: input, shape index: {}]
  %s2 = inlined_call_operand.vmem [shape: f32[1,128], index: 2, kind: input, shape index: {}]
  %s3 = inlined_call_operand.vmem [shape: bf16[128,64], index: 3, kind: input, shape index: {}]
  %s4 = inlined_call_operand.vmem [shape: f32[1,64], index: 4, kind: input, shape index: {}]
  %s5 = inlined_call_operand.vmem [shape: bf16[64,12], index: 5, kind: input, shape index: {}]
  %s6 = inlined_call_operand.vmem [shape: f32[1,12], index: 6, kind: input, shape index: {}]
  %s7 = inlined_call_operand.vmem [shape: bf16[12,12], index: 7, kind: input, shape index: {}]
  %s8 = inlined_call_operand.vmem [shape: f32[1,12], index: 8, kind: input, shape index: {}]
  %s9 = inlined_call_operand.vmem [shape: bf16[12,64], index: 9, kind: input, shape index: {}]
  %s10 = inlined_call_operand.vmem [shape: f32[1,64], index: 10, kind: input, shape index: {}]
  %s11 = inlined_call_operand.vmem [shape: bf16[64,128], index: 11, kind: input, shape index: {}]
  %s12 = inlined_call_operand.vmem [shape: f32[1,128], index: 12, kind: input, shape index: {}]
  %s13 = inlined_call_operand.hbm [shape: bf16[128,896], index: 13, kind: input, shape index: {}]
  %s14 = inlined_call_operand.vmem [shape: f32[1,896], index: 14, kind: input, shape index: {}]
  %s15 = inlined_call_operand.vmem [shape: f32[16,896], index: 15, kind: output, shape index: {}]
  %s16 = sld [smem:[#allocation0]]
  $region78: #{autoencoder_forward.1} parent=0
    _
  %s18 = ssub.s32 1, %s16
  %s19 = scalar_select 0, %s18, %s16
  $region1: #{autoencoder_forward.1} parent=0
    #allocation2 [shape = 'u8[229376]{0}', space=vmem, size = 0x38000, scoped, tag = 'input window, operand 1, single buffered']
    #allocation3 [shape = 's32[1]{0}', space=sflag, size = 0x4, scoped, tag = 'scoped memory for autoencoder_forward.1']
    #allocation4 [shape = 'u8[229376]{0}', space=vmem, size = 0x38000, scoped, tag = 'input window, operand 13, single buffered']
    #allocation5 [shape = 's32[1]{0}', space=sflag, size = 0x4, scoped, tag = 'scoped memory for autoencoder_forward.1']
    %20 = vsyncpa [#allocation3], 0
    %21 = vsyncpa [#allocation5], 0
    // Predicated region
    $region2: #{autoencoder_forward.1} parent=1 // pred_check
      _
    $region3: #{autoencoder_forward.1} parent=1 // pred_check_branch
      %23 = sbr.rel (0) target = $region5
    $region4: #{autoencoder_forward.1} parent=1 // pred_region
      _
    $region5: #{autoencoder_forward.1} parent=1 // pred_fallthru
      _
    // Predicated region
    $region6: #{autoencoder_forward.1} parent=1 // pred_check
      _
    $region7: #{autoencoder_forward.1} parent=1 // pred_check_branch
      %25 = sbr.rel (0) target = $region9
    $region8: #{autoencoder_forward.1} parent=1 // pred_region
      %27 = vsyncadd [#allocation3], 0
      %s28 = sshll.u32 %s1, 4
      %s29 = int_to_ptr.hbm [resolvable:$true] %s28
      %s30 = sshll.u32 [#allocation2], 4
      %s31 = int_to_ptr.vmem [resolvable:$true] %s30
      %36 = dma.hbm_to_vmem [thread:$0]  %s29, 7168, %s31, [#allocation3], 64, 64, 4
    $region9: #{autoencoder_forward.1} parent=1 // pred_fallthru
      _
    // Predicated region
    $region10: #{autoencoder_forward.1} parent=1 // pred_check
      _
    $region11: #{autoencoder_forward.1} parent=1 // pred_check_branch
      %38 = sbr.rel (0) target = $region13
    $region12: #{autoencoder_forward.1} parent=1 // pred_region
      _
    $region13: #{autoencoder_forward.1} parent=1 // pred_fallthru
      _
    // Predicated region
    $region14: #{autoencoder_forward.1} parent=1 // pred_check
      _
    $region15: #{autoencoder_forward.1} parent=1 // pred_check_branch
      %40 = sbr.rel (0) target = $region17
    $region16: #{autoencoder_forward.1} parent=1 // pred_region
      _
    $region17: #{autoencoder_forward.1} parent=1 // pred_fallthru
      _
    // Predicated region
    $region18: #{autoencoder_forward.1} parent=1 // pred_check
      _
    $region19: #{autoencoder_forward.1} parent=1 // pred_check_branch
      %42 = sbr.rel (0) target = $region21
    $region20: #{autoencoder_forward.1} parent=1 // pred_region
      _
    $region21: #{autoencoder_forward.1} parent=1 // pred_fallthru
      _
    // Predicated region
    $region22: #{autoencoder_forward.1} parent=1 // pred_check
      _
    $region23: #{autoencoder_forward.1} parent=1 // pred_check_branch
      %44 = sbr.rel (0) target = $region25
    $region24: #{autoencoder_forward.1} parent=1 // pred_region
      _
    $region25: #{autoencoder_forward.1} parent=1 // pred_fallthru
      _
    // Predicated region
    $region26: #{autoencoder_forward.1} parent=1 // pred_check
      _
    $region27: #{autoencoder_forward.1} parent=1 // pred_check_branch
      %46 = sbr.rel (0) target = $region29
    $region28: #{autoencoder_forward.1} parent=1 // pred_region
      _
    $region29: #{autoencoder_forward.1} parent=1 // pred_fallthru
      _
    // Predicated region
    $region30: #{autoencoder_forward.1} parent=1 // pred_check
      _
    $region31: #{autoencoder_forward.1} parent=1 // pred_check_branch
      %48 = sbr.rel (0) target = $region33
    $region32: #{autoencoder_forward.1} parent=1 // pred_region
      _
    $region33: #{autoencoder_forward.1} parent=1 // pred_fallthru
      _
    // Predicated region
    $region34: #{autoencoder_forward.1} parent=1 // pred_check
      _
    $region35: #{autoencoder_forward.1} parent=1 // pred_check_branch
      %50 = sbr.rel (0) target = $region37
    $region36: #{autoencoder_forward.1} parent=1 // pred_region
      _
    $region37: #{autoencoder_forward.1} parent=1 // pred_fallthru
      _
    // Predicated region
    $region38: #{autoencoder_forward.1} parent=1 // pred_check
      _
    $region39: #{autoencoder_forward.1} parent=1 // pred_check_branch
      %52 = sbr.rel (0) target = $region41
    $region40: #{autoencoder_forward.1} parent=1 // pred_region
      _
    $region41: #{autoencoder_forward.1} parent=1 // pred_fallthru
      _
    // Predicated region
    $region42: #{autoencoder_forward.1} parent=1 // pred_check
      _
    $region43: #{autoencoder_forward.1} parent=1 // pred_check_branch
      %54 = sbr.rel (0) target = $region45
    $region44: #{autoencoder_forward.1} parent=1 // pred_region
      _
    $region45: #{autoencoder_forward.1} parent=1 // pred_fallthru
      _
    // Predicated region
    $region46: #{autoencoder_forward.1} parent=1 // pred_check
      _
    $region47: #{autoencoder_forward.1} parent=1 // pred_check_branch
      %56 = sbr.rel (0) target = $region49
    $region48: #{autoencoder_forward.1} parent=1 // pred_region
      _
    $region49: #{autoencoder_forward.1} parent=1 // pred_fallthru
      _
    // Predicated region
    $region50: #{autoencoder_forward.1} parent=1 // pred_check
      _
    $region51: #{autoencoder_forward.1} parent=1 // pred_check_branch
      %58 = sbr.rel (0) target = $region53
    $region52: #{autoencoder_forward.1} parent=1 // pred_region
      _
    $region53: #{autoencoder_forward.1} parent=1 // pred_fallthru
      _
    // Predicated region
    $region54: #{autoencoder_forward.1} parent=1 // pred_check
      _
    $region55: #{autoencoder_forward.1} parent=1 // pred_check_branch
      %60 = sbr.rel (0) target = $region57
    $region56: #{autoencoder_forward.1} parent=1 // pred_region
      %62 = vsyncadd [#allocation5], 0
      %s63 = sshll.u32 %s13, 4
      %s64 = int_to_ptr.hbm [resolvable:$true] %s63
      %s65 = sshll.u32 [#allocation4], 4
      %s66 = int_to_ptr.vmem [resolvable:$true] %s65
      %71 = dma.hbm_to_vmem [thread:$0]  %s64, 7168, %s66, [#allocation5], 448, 448, 28
    $region57: #{autoencoder_forward.1} parent=1 // pred_fallthru
      _
    // Predicated region
    $region58: #{autoencoder_forward.1} parent=1 // pred_check
      _
    $region59: #{autoencoder_forward.1} parent=1 // pred_check_branch
      %73 = sbr.rel (0) target = $region61
    $region60: #{autoencoder_forward.1} parent=1 // pred_region
      _
    $region61: #{autoencoder_forward.1} parent=1 // pred_fallthru
      _
    // Predicated region
    $region62: #{autoencoder_forward.1} parent=1 // pred_check
      _
    $region63: #{autoencoder_forward.1} parent=1 // pred_check_branch
      %75 = sbr.rel (0) target = $region65
    $region64: #{autoencoder_forward.1} parent=1 // pred_region
      %77 = dma.done [#allocation3], 7168
    $region65: #{autoencoder_forward.1} parent=1 // pred_fallthru
      _
    // Predicated region
    $region66: #{autoencoder_forward.1} parent=1 // pred_check
      _
    $region67: #{autoencoder_forward.1} parent=1 // pred_check_branch
      %79 = sbr.rel (0) target = $region69
    $region68: #{autoencoder_forward.1} parent=1 // pred_region
      %81 = dma.done [#allocation5], 7168
    $region69: #{autoencoder_forward.1} parent=1 // pred_fallthru
      _
    %v83 = vld [vmem:[%s0] sm:$0xff]
    %v84 = vld [vmem:[%s0 + $0x8] sm:$0xff]
    %v85 = vld [vmem:[%s0 + $0x10] sm:$0xff]
    %v86 = vld [vmem:[%s0 + $0x18] sm:$0xf]
    %v87 = vld [vmem:[%s0 + $0x1c] sm:$0xff]
    %v88 = vld [vmem:[%s0 + $0x24] sm:$0xff]
    %v89 = vld [vmem:[%s0 + $0x2c] sm:$0xff]
    %v90 = vld [vmem:[%s0 + $0x34] sm:$0xf]
    %v91 = vld [vmem:[#allocation2] sm:$0xf]
    %v92 = vld [vmem:[#allocation2 + $0x4] sm:$0xf]
    %v93 = vld [vmem:[#allocation2 + $0x8] sm:$0xf]
    %v94 = vld [vmem:[#allocation2 + $0xc] sm:$0xf]
    %v95 = vld [vmem:[#allocation2 + $0x10] sm:$0xf]
    %v96 = vld [vmem:[#allocation2 + $0x14] sm:$0xf]
    %v97 = vld [vmem:[#allocation2 + $0x18] sm:$0xf]
    %v98 = vld [vmem:[#allocation2 + $0x1c] sm:$0xf]
    %v99 = vld [vmem:[#allocation2 + $0x20] sm:$0xf]
    %v100 = vld [vmem:[#allocation2 + $0x24] sm:$0xf]
    %v101 = vld [vmem:[#allocation2 + $0x28] sm:$0xf]
    %v102 = vld [vmem:[#allocation2 + $0x2c] sm:$0xf]
    %v103 = vld [vmem:[#allocation2 + $0x30] sm:$0xf]
    %v104 = vld [vmem:[#allocation2 + $0x34] sm:$0xf]
    %v105 = vld [vmem:[#allocation2 + $0x38] sm:$0xf]
    %v106 = vld [vmem:[#allocation2 + $0x3c] sm:$0xf]
    %v107 = vld [vmem:[#allocation2 + $0x40] sm:$0xf]
    %v108 = vld [vmem:[#allocation2 + $0x44] sm:$0xf]
    %v109 = vld [vmem:[#allocation2 + $0x48] sm:$0xf]
    %v110 = vld [vmem:[#allocation2 + $0x4c] sm:$0xf]
    %v111 = vld [vmem:[#allocation2 + $0x50] sm:$0xf]
    %v112 = vld [vmem:[#allocation2 + $0x54] sm:$0xf]
    %v113 = vld [vmem:[#allocation2 + $0x58] sm:$0xf]
    %v114 = vld [vmem:[#allocation2 + $0x5c] sm:$0xf]
    %v115 = vld [vmem:[#allocation2 + $0x60] sm:$0xf]
    %v116 = vld [vmem:[#allocation2 + $0x64] sm:$0xf]
    %v117 = vld [vmem:[#allocation2 + $0x68] sm:$0xf]
    %v118 = vld [vmem:[#allocation2 + $0x6c] sm:$0xf]
    %v119 = vld [vmem:[#allocation2 + $0x70] sm:$0xf]
    %v120 = vld [vmem:[#allocation2 + $0x74] sm:$0xf]
    %v121 = vld [vmem:[#allocation2 + $0x78] sm:$0xf]
    %v122 = vld [vmem:[#allocation2 + $0x7c] sm:$0xf]
    %v123 = vld [vmem:[#allocation2 + $0x80] sm:$0xf]
    %v124 = vld [vmem:[#allocation2 + $0x84] sm:$0xf]
    %v125 = vld [vmem:[#allocation2 + $0x88] sm:$0xf]
    %v126 = vld [vmem:[#allocation2 + $0x8c] sm:$0xf]
    %v127 = vld [vmem:[#allocation2 + $0x90] sm:$0xf]
    %v128 = vld [vmem:[#allocation2 + $0x94] sm:$0xf]
    %v129 = vld [vmem:[#allocation2 + $0x98] sm:$0xf]
    %v130 = vld [vmem:[#allocation2 + $0x9c] sm:$0xf]
    %v131 = vld [vmem:[#allocation2 + $0xa0] sm:$0xf]
    %v132 = vld [vmem:[#allocation2 + $0xa4] sm:$0xf]
    %v133 = vld [vmem:[#allocation2 + $0xa8] sm:$0xf]
    %v134 = vld [vmem:[#allocation2 + $0xac] sm:$0xf]
    %v135 = vld [vmem:[#allocation2 + $0xb0] sm:$0xf]
    %v136 = vld [vmem:[#allocation2 + $0xb4] sm:$0xf]
    %v137 = vld [vmem:[#allocation2 + $0xb8] sm:$0xf]
    %v138 = vld [vmem:[#allocation2 + $0xbc] sm:$0xf]
    %v139 = vld [vmem:[#allocation2 + $0xc0] sm:$0xf]
    %v140 = vld [vmem:[#allocation2 + $0xc4] sm:$0xf]
    %v141 = vld [vmem:[#allocation2 + $0xc8] sm:$0xf]
    %v142 = vld [vmem:[#allocation2 + $0xcc] sm:$0xf]
    %v143 = vld [vmem:[#allocation2 + $0xd0] sm:$0xf]
    %v144 = vld [vmem:[#allocation2 + $0xd4] sm:$0xf]
    %v145 = vld [vmem:[#allocation2 + $0xd8] sm:$0xf]
    %v146 = vld [vmem:[#allocation2 + $0xdc] sm:$0xf]
    %v147 = vld [vmem:[#allocation2 + $0xe0] sm:$0xf]
    %v148 = vld [vmem:[#allocation2 + $0xe4] sm:$0xf]
    %v149 = vld [vmem:[#allocation2 + $0xe8] sm:$0xf]
    %v150 = vld [vmem:[#allocation2 + $0xec] sm:$0xf]
    %v151 = vld [vmem:[#allocation2 + $0xf0] sm:$0xf]
    %v152 = vld [vmem:[#allocation2 + $0xf4] sm:$0xf]
    %v153 = vld [vmem:[#allocation2 + $0xf8] sm:$0xf]
    %v154 = vld [vmem:[#allocation2 + $0xfc] sm:$0xf]
    %v155 = vld [vmem:[#allocation2 + $0x100] sm:$0xf]
    %v156 = vld [vmem:[#allocation2 + $0x104] sm:$0xf]
    %v157 = vld [vmem:[#allocation2 + $0x108] sm:$0xf]
    %v158 = vld [vmem:[#allocation2 + $0x10c] sm:$0xf]
    %v159 = vld [vmem:[#allocation2 + $0x110] sm:$0xf]
    %v160 = vld [vmem:[#allocation2 + $0x114] sm:$0xf]
    %v161 = vld [vmem:[#allocation2 + $0x118] sm:$0xf]
    %v162 = vld [vmem:[#allocation2 + $0x11c] sm:$0xf]
    %v163 = vld [vmem:[#allocation2 + $0x120] sm:$0xf]
    %v164 = vld [vmem:[#allocation2 + $0x124] sm:$0xf]
    %v165 = vld [vmem:[#allocation2 + $0x128] sm:$0xf]
    %v166 = vld [vmem:[#allocation2 + $0x12c] sm:$0xf]
    %v167 = vld [vmem:[#allocation2 + $0x130] sm:$0xf]
    %v168 = vld [vmem:[#allocation2 + $0x134] sm:$0xf]
    %v169 = vld [vmem:[#allocation2 + $0x138] sm:$0xf]
    %v170 = vld [vmem:[#allocation2 + $0x13c] sm:$0xf]
    %v171 = vld [vmem:[#allocation2 + $0x140] sm:$0xf]
    %v172 = vld [vmem:[#allocation2 + $0x144] sm:$0xf]
    %v173 = vld [vmem:[#allocation2 + $0x148] sm:$0xf]
    %v174 = vld [vmem:[#allocation2 + $0x14c] sm:$0xf]
    %v175 = vld [vmem:[#allocation2 + $0x150] sm:$0xf]
    %v176 = vld [vmem:[#allocation2 + $0x154] sm:$0xf]
    %v177 = vld [vmem:[#allocation2 + $0x158] sm:$0xf]
    %v178 = vld [vmem:[#allocation2 + $0x15c] sm:$0xf]
    %v179 = vld [vmem:[#allocation2 + $0x160] sm:$0xf]
    %v180 = vld [vmem:[#allocation2 + $0x164] sm:$0xf]
    %v181 = vld [vmem:[#allocation2 + $0x168] sm:$0xf]
    %v182 = vld [vmem:[#allocation2 + $0x16c] sm:$0xf]
    %v183 = vld [vmem:[#allocation2 + $0x170] sm:$0xf]
    %v184 = vld [vmem:[#allocation2 + $0x174] sm:$0xf]
    %v185 = vld [vmem:[#allocation2 + $0x178] sm:$0xf]
    %v186 = vld [vmem:[#allocation2 + $0x17c] sm:$0xf]
    %v187 = vld [vmem:[#allocation2 + $0x180] sm:$0xf]
    %v188 = vld [vmem:[#allocation2 + $0x184] sm:$0xf]
    %v189 = vld [vmem:[#allocation2 + $0x188] sm:$0xf]
    %v190 = vld [vmem:[#allocation2 + $0x18c] sm:$0xf]
    %v191 = vld [vmem:[#allocation2 + $0x190] sm:$0xf]
    %v192 = vld [vmem:[#allocation2 + $0x194] sm:$0xf]
    %v193 = vld [vmem:[#allocation2 + $0x198] sm:$0xf]
    %v194 = vld [vmem:[#allocation2 + $0x19c] sm:$0xf]
    %v195 = vld [vmem:[#allocation2 + $0x1a0] sm:$0xf]
    %v196 = vld [vmem:[#allocation2 + $0x1a4] sm:$0xf]
    %v197 = vld [vmem:[#allocation2 + $0x1a8] sm:$0xf]
    %v198 = vld [vmem:[#allocation2 + $0x1ac] sm:$0xf]
    %v199 = vld [vmem:[#allocation2 + $0x1b0] sm:$0xf]
    %v200 = vld [vmem:[#allocation2 + $0x1b4] sm:$0xf]
    %v201 = vld [vmem:[#allocation2 + $0x1b8] sm:$0xf]
    %v202 = vld [vmem:[#allocation2 + $0x1bc] sm:$0xf]
    %v203 = vld [vmem:[%s2] sm:$0x1]
    %v205 = vperm.slane %v203, 0
    %v215 = vunpack.c.l.b16 %v83
    %v216 = vunpack.c.h.b16 %v83
    %v217 = vunpack.c.l.b16 %v84
    %v218 = vunpack.c.h.b16 %v84
    %v219 = vunpack.c.l.b16 %v85
    %v220 = vunpack.c.h.b16 %v85
    %v221 = vunpack.c.l.b16 %v86
    %v222 = vunpack.c.l.b16 %v87
    %v223 = vunpack.c.h.b16 %v87
    %v224 = vunpack.c.l.b16 %v88
    %v225 = vunpack.c.h.b16 %v88
    %v226 = vunpack.c.l.b16 %v89
    %v227 = vunpack.c.h.b16 %v89
    %v228 = vunpack.c.l.b16 %v90
    %v229 = vpack.c.b16 %v222, %v215
    %v230 = vpack.c.b16 %v223, %v216
    %v231 = vpack.c.b16 %v224, %v217
    %v232 = vpack.c.b16 %v225, %v218
    %v233 = vpack.c.b16 %v226, %v219
    %v234 = vpack.c.b16 %v227, %v220
    %v235 = vpack.c.b16 %v228, %v221
    %v355 = vunpack.c.l.b16 %v91
    %v356 = vunpack.c.l.b16 %v92
    %v357 = vunpack.c.l.b16 %v93
    %v358 = vunpack.c.l.b16 %v94
    %v359 = vunpack.c.l.b16 %v95
    %v360 = vunpack.c.l.b16 %v96
    %v361 = vunpack.c.l.b16 %v97
    %v362 = vunpack.c.l.b16 %v98
    %v363 = vunpack.c.l.b16 %v99
    %v364 = vunpack.c.l.b16 %v100
    %v365 = vunpack.c.l.b16 %v101
    %v366 = vunpack.c.l.b16 %v102
    %v367 = vunpack.c.l.b16 %v103
    %v368 = vunpack.c.l.b16 %v104
    %v369 = vunpack.c.l.b16 %v105
    %v370 = vunpack.c.l.b16 %v106
    %v371 = vunpack.c.l.b16 %v107
    %v372 = vunpack.c.l.b16 %v108
    %v373 = vunpack.c.l.b16 %v109
    %v374 = vunpack.c.l.b16 %v110
    %v375 = vunpack.c.l.b16 %v111
    %v376 = vunpack.c.l.b16 %v112
    %v377 = vunpack.c.l.b16 %v113
    %v378 = vunpack.c.l.b16 %v114
    %v379 = vunpack.c.l.b16 %v115
    %v380 = vunpack.c.l.b16 %v116
    %v381 = vunpack.c.l.b16 %v117
    %v382 = vunpack.c.l.b16 %v118
    %v383 = vunpack.c.l.b16 %v119
    %v384 = vunpack.c.l.b16 %v120
    %v385 = vunpack.c.l.b16 %v121
    %v386 = vunpack.c.l.b16 %v122
    %v387 = vunpack.c.l.b16 %v123
    %v388 = vunpack.c.l.b16 %v124
    %v389 = vunpack.c.l.b16 %v125
    %v390 = vunpack.c.l.b16 %v126
    %v391 = vunpack.c.l.b16 %v127
    %v392 = vunpack.c.l.b16 %v128
    %v393 = vunpack.c.l.b16 %v129
    %v394 = vunpack.c.l.b16 %v130
    %v395 = vunpack.c.l.b16 %v131
    %v396 = vunpack.c.l.b16 %v132
    %v397 = vunpack.c.l.b16 %v133
    %v398 = vunpack.c.l.b16 %v134
    %v399 = vunpack.c.l.b16 %v135
    %v400 = vunpack.c.l.b16 %v136
    %v401 = vunpack.c.l.b16 %v137
    %v402 = vunpack.c.l.b16 %v138
    %v403 = vunpack.c.l.b16 %v139
    %v404 = vunpack.c.l.b16 %v140
    %v405 = vunpack.c.l.b16 %v141
    %v406 = vunpack.c.l.b16 %v142
    %v407 = vunpack.c.l.b16 %v143
    %v408 = vunpack.c.l.b16 %v144
    %v409 = vunpack.c.l.b16 %v145
    %v410 = vunpack.c.l.b16 %v146
    %v411 = vunpack.c.l.b16 %v147
    %v412 = vunpack.c.l.b16 %v148
    %v413 = vunpack.c.l.b16 %v149
    %v414 = vunpack.c.l.b16 %v150
    %v415 = vunpack.c.l.b16 %v151
    %v416 = vunpack.c.l.b16 %v152
    %v417 = vunpack.c.l.b16 %v153
    %v418 = vunpack.c.l.b16 %v154
    %v419 = vunpack.c.l.b16 %v155
    %v420 = vunpack.c.l.b16 %v156
    %v421 = vunpack.c.l.b16 %v157
    %v422 = vunpack.c.l.b16 %v158
    %v423 = vunpack.c.l.b16 %v159
    %v424 = vunpack.c.l.b16 %v160
    %v425 = vunpack.c.l.b16 %v161
    %v426 = vunpack.c.l.b16 %v162
    %v427 = vunpack.c.l.b16 %v163
    %v428 = vunpack.c.l.b16 %v164
    %v429 = vunpack.c.l.b16 %v165
    %v430 = vunpack.c.l.b16 %v166
    %v431 = vunpack.c.l.b16 %v167
    %v432 = vunpack.c.l.b16 %v168
    %v433 = vunpack.c.l.b16 %v169
    %v434 = vunpack.c.l.b16 %v170
    %v435 = vunpack.c.l.b16 %v171
    %v436 = vunpack.c.l.b16 %v172
    %v437 = vunpack.c.l.b16 %v173
    %v438 = vunpack.c.l.b16 %v174
    %v439 = vunpack.c.l.b16 %v175
    %v440 = vunpack.c.l.b16 %v176
    %v441 = vunpack.c.l.b16 %v177
    %v442 = vunpack.c.l.b16 %v178
    %v443 = vunpack.c.l.b16 %v179
    %v444 = vunpack.c.l.b16 %v180
    %v445 = vunpack.c.l.b16 %v181
    %v446 = vunpack.c.l.b16 %v182
    %v447 = vunpack.c.l.b16 %v183
    %v448 = vunpack.c.l.b16 %v184
    %v449 = vunpack.c.l.b16 %v185
    %v450 = vunpack.c.l.b16 %v186
    %v451 = vunpack.c.l.b16 %v187
    %v452 = vunpack.c.l.b16 %v188
    %v453 = vunpack.c.l.b16 %v189
    %v454 = vunpack.c.l.b16 %v190
    %v455 = vunpack.c.l.b16 %v191
    %v456 = vunpack.c.l.b16 %v192
    %v457 = vunpack.c.l.b16 %v193
    %v458 = vunpack.c.l.b16 %v194
    %v459 = vunpack.c.l.b16 %v195
    %v460 = vunpack.c.l.b16 %v196
    %v461 = vunpack.c.l.b16 %v197
    %v462 = vunpack.c.l.b16 %v198
    %v463 = vunpack.c.l.b16 %v199
    %v464 = vunpack.c.l.b16 %v200
    %v465 = vunpack.c.l.b16 %v201
    %v466 = vunpack.c.l.b16 %v202
    %v467 = vpack.c.b16 %v356, %v355
    %v468 = vpack.c.b16 %v358, %v357
    %v469 = vpack.c.b16 %v360, %v359
    %v470 = vpack.c.b16 %v362, %v361
    %v471 = vpack.c.b16 %v364, %v363
    %v472 = vpack.c.b16 %v366, %v365
    %v473 = vpack.c.b16 %v368, %v367
    %v474 = vpack.c.b16 %v370, %v369
    %v475 = vpack.c.b16 %v372, %v371
    %v476 = vpack.c.b16 %v374, %v373
    %v477 = vpack.c.b16 %v376, %v375
    %v478 = vpack.c.b16 %v378, %v377
    %v479 = vpack.c.b16 %v380, %v379
    %v480 = vpack.c.b16 %v382, %v381
    %v481 = vpack.c.b16 %v384, %v383
    %v482 = vpack.c.b16 %v386, %v385
    %v483 = vpack.c.b16 %v388, %v387
    %v484 = vpack.c.b16 %v390, %v389
    %v485 = vpack.c.b16 %v392, %v391
    %v486 = vpack.c.b16 %v394, %v393
    %v487 = vpack.c.b16 %v396, %v395
    %v488 = vpack.c.b16 %v398, %v397
    %v489 = vpack.c.b16 %v400, %v399
    %v490 = vpack.c.b16 %v402, %v401
    %v491 = vpack.c.b16 %v404, %v403
    %v492 = vpack.c.b16 %v406, %v405
    %v493 = vpack.c.b16 %v408, %v407
    %v494 = vpack.c.b16 %v410, %v409
    %v495 = vpack.c.b16 %v412, %v411
    %v496 = vpack.c.b16 %v414, %v413
    %v497 = vpack.c.b16 %v416, %v415
    %v498 = vpack.c.b16 %v418, %v417
    %v499 = vpack.c.b16 %v420, %v419
    %v500 = vpack.c.b16 %v422, %v421
    %v501 = vpack.c.b16 %v424, %v423
    %v502 = vpack.c.b16 %v426, %v425
    %v503 = vpack.c.b16 %v428, %v427
    %v504 = vpack.c.b16 %v430, %v429
    %v505 = vpack.c.b16 %v432, %v431
    %v506 = vpack.c.b16 %v434, %v433
    %v507 = vpack.c.b16 %v436, %v435
    %v508 = vpack.c.b16 %v438, %v437
    %v509 = vpack.c.b16 %v440, %v439
    %v510 = vpack.c.b16 %v442, %v441
    %v511 = vpack.c.b16 %v444, %v443
    %v512 = vpack.c.b16 %v446, %v445
    %v513 = vpack.c.b16 %v448, %v447
    %v514 = vpack.c.b16 %v450, %v449
    %v515 = vpack.c.b16 %v452, %v451
    %v516 = vpack.c.b16 %v454, %v453
    %v517 = vpack.c.b16 %v456, %v455
    %v518 = vpack.c.b16 %v458, %v457
    %v519 = vpack.c.b16 %v460, %v459
    %v520 = vpack.c.b16 %v462, %v461
    %v521 = vpack.c.b16 %v464, %v463
    %v522 = vpack.c.b16 %v466, %v465
    %579 = vmatpush.bf16.msra.mxu0 %v474
    %580 = vmatpush.bf16.msra.mxu0 %v473
    %581 = vmatpush.bf16.msra.mxu0 %v472
    %582 = vmatpush.bf16.msra.mxu0 %v471
    %583 = vmatpush.bf16.msra.mxu0 %v470
    %584 = vmatpush.bf16.msra.mxu0 %v469
    %585 = vmatpush.bf16.msra.mxu0 %v468
    %586 = vmatpush.bf16.msra.mxu0 %v467
    %587 = vmatmul.bf16.gmra.mxu0 %v229
    %v588 = vpop.f32.mrf.mxu0
    %v589 = vadd.f32 %v205, %v588
    %v590 = vpop.f32.mrf.mxu0
    %v591 = vadd.f32 %v205, %v590
    %592 = vdwg.mxu0
    %593 = vmatpush.bf16.msra.mxu0 %v482
    %594 = vmatpush.bf16.msra.mxu0 %v481
    %595 = vmatpush.bf16.msra.mxu0 %v480
    %596 = vmatpush.bf16.msra.mxu0 %v479
    %597 = vmatpush.bf16.msra.mxu0 %v478
    %598 = vmatpush.bf16.msra.mxu0 %v477
    %599 = vmatpush.bf16.msra.mxu0 %v476
    %600 = vmatpush.bf16.msra.mxu0 %v475
    %601 = vmatmul.bf16.gmra.mxu0 %v230
    %v602 = vpop.f32.mrf.mxu0
    %v603 = vadd.f32 %v589, %v602
    %v604 = vpop.f32.mrf.mxu0
    %v605 = vadd.f32 %v591, %v604
    %606 = vdwg.mxu0
    %607 = vmatpush.bf16.msra.mxu0 %v490
    %608 = vmatpush.bf16.msra.mxu0 %v489
    %609 = vmatpush.bf16.msra.mxu0 %v488
    %610 = vmatpush.bf16.msra.mxu0 %v487
    %611 = vmatpush.bf16.msra.mxu0 %v486
    %612 = vmatpush.bf16.msra.mxu0 %v485
    %613 = vmatpush.bf16.msra.mxu0 %v484
    %614 = vmatpush.bf16.msra.mxu0 %v483
    %615 = vmatmul.bf16.gmra.mxu0 %v231
    %v616 = vpop.f32.mrf.mxu0
    %v617 = vadd.f32 %v603, %v616
    %v618 = vpop.f32.mrf.mxu0
    %v619 = vadd.f32 %v605, %v618
    %620 = vdwg.mxu0
    %621 = vmatpush.bf16.msra.mxu0 %v498
    %622 = vmatpush.bf16.msra.mxu0 %v497
    %623 = vmatpush.bf16.msra.mxu0 %v496
    %624 = vmatpush.bf16.msra.mxu0 %v495
    %625 = vmatpush.bf16.msra.mxu0 %v494
    %626 = vmatpush.bf16.msra.mxu0 %v493
    %627 = vmatpush.bf16.msra.mxu0 %v492
    %628 = vmatpush.bf16.msra.mxu0 %v491
    %629 = vmatmul.bf16.gmra.mxu0 %v232
    %v630 = vpop.f32.mrf.mxu0
    %v631 = vadd.f32 %v617, %v630
    %v632 = vpop.f32.mrf.mxu0
    %v633 = vadd.f32 %v619, %v632
    %634 = vdwg.mxu0
    %635 = vmatpush.bf16.msra.mxu0 %v506
    %636 = vmatpush.bf16.msra.mxu0 %v505
    %637 = vmatpush.bf16.msra.mxu0 %v504
    %638 = vmatpush.bf16.msra.mxu0 %v503
    %639 = vmatpush.bf16.msra.mxu0 %v502
    %640 = vmatpush.bf16.msra.mxu0 %v501
    %641 = vmatpush.bf16.msra.mxu0 %v500
    %642 = vmatpush.bf16.msra.mxu0 %v499
    %643 = vmatmul.bf16.gmra.mxu0 %v233
    %v644 = vpop.f32.mrf.mxu0
    %v645 = vadd.f32 %v631, %v644
    %v646 = vpop.f32.mrf.mxu0
    %v647 = vadd.f32 %v633, %v646
    %648 = vdwg.mxu0
    %649 = vmatpush.bf16.msra.mxu0 %v514
    %650 = vmatpush.bf16.msra.mxu0 %v513
    %651 = vmatpush.bf16.msra.mxu0 %v512
    %652 = vmatpush.bf16.msra.mxu0 %v511
    %653 = vmatpush.bf16.msra.mxu0 %v510
    %654 = vmatpush.bf16.msra.mxu0 %v509
    %655 = vmatpush.bf16.msra.mxu0 %v508
    %656 = vmatpush.bf16.msra.mxu0 %v507
    %657 = vmatmul.bf16.gmra.mxu0 %v234
    %v658 = vpop.f32.mrf.mxu0
    %v659 = vadd.f32 %v645, %v658
    %v660 = vpop.f32.mrf.mxu0
    %v661 = vadd.f32 %v647, %v660
    %662 = vdwg.mxu0
    %663 = vmatpush.bf16.msra.mxu0 %v522
    %664 = vmatpush.bf16.msra.mxu0 %v521
    %665 = vmatpush.bf16.msra.mxu0 %v520
    %666 = vmatpush.bf16.msra.mxu0 %v519
    %667 = vmatpush.bf16.msra.mxu0 %v518
    %668 = vmatpush.bf16.msra.mxu0 %v517
    %669 = vmatpush.bf16.msra.mxu0 %v516
    %670 = vmatpush.bf16.msra.mxu0 %v515
    %671 = vmatmul.bf16.gmra.mxu0 %v235
    %v672 = vpop.f32.mrf.mxu0
    %v673 = vadd.f32 %v659, %v672
    %v674 = vpop.f32.mrf.mxu0
    %v675 = vadd.f32 %v661, %v674
    %676 = vdwg.mxu0
    %v677 = vmax.f32 %v673, 0.0
    %v678 = vmax.f32 %v675, 0.0
    %v679 = vpack.c.bf16 %v678, %v677
    %v680 = vld [vmem:[%s3] sm:$0xf]
    %v681 = vld [vmem:[%s3 + $0x4] sm:$0xf]
    %v682 = vld [vmem:[%s3 + $0x8] sm:$0xf]
    %v683 = vld [vmem:[%s3 + $0xc] sm:$0xf]
    %v684 = vld [vmem:[%s3 + $0x10] sm:$0xf]
    %v685 = vld [vmem:[%s3 + $0x14] sm:$0xf]
    %v686 = vld [vmem:[%s3 + $0x18] sm:$0xf]
    %v687 = vld [vmem:[%s3 + $0x1c] sm:$0xf]
    %v688 = vld [vmem:[%s3 + $0x20] sm:$0xf]
    %v689 = vld [vmem:[%s3 + $0x24] sm:$0xf]
    %v690 = vld [vmem:[%s3 + $0x28] sm:$0xf]
    %v691 = vld [vmem:[%s3 + $0x2c] sm:$0xf]
    %v692 = vld [vmem:[%s3 + $0x30] sm:$0xf]
    %v693 = vld [vmem:[%s3 + $0x34] sm:$0xf]
    %v694 = vld [vmem:[%s3 + $0x38] sm:$0xf]
    %v695 = vld [vmem:[%s3 + $0x3c] sm:$0xf]
    %v696 = vld [vmem:[%s4] sm:$0x1]
    %v698 = vperm.slane %v696, 0
    %v716 = vunpack.c.l.b16 %v680
    %v717 = vunpack.c.l.b16 %v681
    %v718 = vunpack.c.l.b16 %v682
    %v719 = vunpack.c.l.b16 %v683
    %v720 = vunpack.c.l.b16 %v684
    %v721 = vunpack.c.l.b16 %v685
    %v722 = vunpack.c.l.b16 %v686
    %v723 = vunpack.c.l.b16 %v687
    %v724 = vunpack.c.l.b16 %v688
    %v725 = vunpack.c.l.b16 %v689
    %v726 = vunpack.c.l.b16 %v690
    %v727 = vunpack.c.l.b16 %v691
    %v728 = vunpack.c.l.b16 %v692
    %v729 = vunpack.c.l.b16 %v693
    %v730 = vunpack.c.l.b16 %v694
    %v731 = vunpack.c.l.b16 %v695
    %v732 = vpack.c.b16 %v717, %v716
    %v733 = vpack.c.b16 %v719, %v718
    %v734 = vpack.c.b16 %v721, %v720
    %v735 = vpack.c.b16 %v723, %v722
    %v736 = vpack.c.b16 %v725, %v724
    %v737 = vpack.c.b16 %v727, %v726
    %v738 = vpack.c.b16 %v729, %v728
    %v739 = vpack.c.b16 %v731, %v730
    %748 = vmatpush.bf16.msra.mxu0 %v739
    %749 = vmatpush.bf16.msra.mxu0 %v738
    %750 = vmatpush.bf16.msra.mxu0 %v737
    %751 = vmatpush.bf16.msra.mxu0 %v736
    %752 = vmatpush.bf16.msra.mxu0 %v735
    %753 = vmatpush.bf16.msra.mxu0 %v734
    %754 = vmatpush.bf16.msra.mxu0 %v733
    %755 = vmatpush.bf16.msra.mxu0 %v732
    %756 = vmatmul.bf16.gmra.mxu0 %v679
    %v757 = vpop.f32.mrf.mxu0
    %v758 = vadd.f32 %v698, %v757
    %v759 = vpop.f32.mrf.mxu0
    %v760 = vadd.f32 %v698, %v759
    %761 = vdwg.mxu0
    %v762 = vmax.f32 %v758, 0.0
    %v763 = vmax.f32 %v760, 0.0
    %v764 = vpack.c.bf16 %v763, %v762
    %v765 = vld [vmem:[%s5] sm:$0xf]
    %v766 = vld [vmem:[%s5 + $0x4] sm:$0xf]
    %v767 = vld [vmem:[%s5 + $0x8] sm:$0xf]
    %v768 = vld [vmem:[%s5 + $0xc] sm:$0xf]
    %v769 = vld [vmem:[%s5 + $0x10] sm:$0xf]
    %v770 = vld [vmem:[%s5 + $0x14] sm:$0xf]
    %v771 = vld [vmem:[%s5 + $0x18] sm:$0xf]
    %v772 = vld [vmem:[%s5 + $0x1c] sm:$0xf]
    %v773 = vld [vmem:[%s6] sm:$0x1]
    %v775 = vperm.slane %v773, 0
    %v785 = vunpack.c.l.b16 %v765
    %v786 = vunpack.c.l.b16 %v766
    %v787 = vunpack.c.l.b16 %v767
    %v788 = vunpack.c.l.b16 %v768
    %v789 = vunpack.c.l.b16 %v769
    %v790 = vunpack.c.l.b16 %v770
    %v791 = vunpack.c.l.b16 %v771
    %v792 = vunpack.c.l.b16 %v772
    %v793 = vpack.c.b16 %v786, %v785
    %v794 = vpack.c.b16 %v788, %v787
    %v795 = vpack.c.b16 %v790, %v789
    %v796 = vpack.c.b16 %v792, %v791
    %vm801 = vcmask 523264
    %v803 = vsel %vm801, %v764, 0
    %805 = vmatpush.bf16.msra.mxu0 0
    %806 = vmatpush.bf16.msra.mxu0 0
    %807 = vmatpush.bf16.msra.mxu0 0
    %808 = vmatpush.bf16.msra.mxu0 0
    %809 = vmatpush.bf16.msra.mxu0 %v796
    %810 = vmatpush.bf16.msra.mxu0 %v795
    %811 = vmatpush.bf16.msra.mxu0 %v794
    %812 = vmatpush.bf16.msra.mxu0 %v793
    %813 = vmatmul.bf16.gmra.mxu0 %v803
    %v814 = vpop.f32.mrf.mxu0
    %v815 = vadd.f32 %v775, %v814
    %v816 = vpop.f32.mrf.mxu0
    %v817 = vadd.f32 %v775, %v816
    %818 = vdwg.mxu0
    %v819 = vmax.f32 %v815, 0.0
    %v820 = vmax.f32 %v817, 0.0
    %v821 = vpack.c.bf16 %v820, %v819
    %v822 = vld [vmem:[%s7] sm:$0xf]
    %v823 = vld [vmem:[%s7 + $0x4] sm:$0x3]
    %v824 = vld [vmem:[%s8] sm:$0x1]
    %v826 = vperm.slane %v824, 0
    %v830 = vunpack.c.l.b16 %v822
    %v831 = vunpack.c.l.b16 %v823
    %v832 = vpack.c.b16 %v831, %v830
    %vm833 = vcmask 97280
    %v835 = vsel %vm833, %v821, 0
    %vm837 = vcmask 1045504
    %v839 = vsel %vm837, %v832, 0
    %841 = vmatpush.bf16.msra.mxu0 0
    %842 = vmatpush.bf16.msra.mxu0 0
    %843 = vmatpush.bf16.msra.mxu0 0
    %844 = vmatpush.bf16.msra.mxu0 0
    %845 = vmatpush.bf16.msra.mxu0 0
    %846 = vmatpush.bf16.msra.mxu0 0
    %847 = vmatpush.bf16.msra.mxu0 0
    %848 = vmatpush.bf16.msra.mxu0 %v839
    %849 = vmatmul.bf16.gmra.mxu0 %v835
    %v850 = vpop.f32.mrf.mxu0
    %v851 = vadd.f32 %v826, %v850
    %v852 = vpop.f32.mrf.mxu0
    %v853 = vadd.f32 %v826, %v852
    %854 = vdwg.mxu0
    %v855 = vmax.f32 %v851, 0.0
    %v856 = vmax.f32 %v853, 0.0
    %v857 = vpack.c.bf16 %v856, %v855
    %v858 = vld [vmem:[%s9] sm:$0xf]
    %v859 = vld [vmem:[%s9 + $0x4] sm:$0x3]
    %v860 = vld [vmem:[%s10] sm:$0x1]
    %v862 = vperm.slane %v860, 0
    %v866 = vunpack.c.l.b16 %v858
    %v867 = vunpack.c.l.b16 %v859
    %v868 = vpack.c.b16 %v867, %v866
    %v870 = vsel %vm833, %v857, 0
    %v873 = vsel %vm837, %v868, 0
    %875 = vmatpush.bf16.msra.mxu0 0
    %876 = vmatpush.bf16.msra.mxu0 0
    %877 = vmatpush.bf16.msra.mxu0 0
    %878 = vmatpush.bf16.msra.mxu0 0
    %879 = vmatpush.bf16.msra.mxu0 0
    %880 = vmatpush.bf16.msra.mxu0 0
    %881 = vmatpush.bf16.msra.mxu0 0
    %882 = vmatpush.bf16.msra.mxu0 %v873
    %883 = vmatmul.bf16.gmra.mxu0 %v870
    %v884 = vpop.f32.mrf.mxu0
    %v885 = vadd.f32 %v862, %v884
    %v886 = vpop.f32.mrf.mxu0
    %v887 = vadd.f32 %v862, %v886
    %888 = vdwg.mxu0
    %v889 = vmax.f32 %v885, 0.0
    %v890 = vmax.f32 %v887, 0.0
    %v891 = vpack.c.bf16 %v890, %v889
    %v892 = vld [vmem:[%s11] sm:$0xf]
    %v893 = vld [vmem:[%s11 + $0x4] sm:$0xf]
    %v894 = vld [vmem:[%s11 + $0x8] sm:$0xf]
    %v895 = vld [vmem:[%s11 + $0xc] sm:$0xf]
    %v896 = vld [vmem:[%s11 + $0x10] sm:$0xf]
    %v897 = vld [vmem:[%s11 + $0x14] sm:$0xf]
    %v898 = vld [vmem:[%s11 + $0x18] sm:$0xf]
    %v899 = vld [vmem:[%s11 + $0x1c] sm:$0xf]
    %v900 = vld [vmem:[%s12] sm:$0x1]
    %v902 = vperm.slane %v900, 0
    %v912 = vunpack.c.l.b16 %v892
    %v913 = vunpack.c.l.b16 %v893
    %v914 = vunpack.c.l.b16 %v894
    %v915 = vunpack.c.l.b16 %v895
    %v916 = vunpack.c.l.b16 %v896
    %v917 = vunpack.c.l.b16 %v897
    %v918 = vunpack.c.l.b16 %v898
    %v919 = vunpack.c.l.b16 %v899
    %v920 = vpack.c.b16 %v913, %v912
    %v921 = vpack.c.b16 %v915, %v914
    %v922 = vpack.c.b16 %v917, %v916
    %v923 = vpack.c.b16 %v919, %v918
    %v929 = vsel %vm801, %v891, 0
    %931 = vmatpush.bf16.msra.mxu0 0
    %932 = vmatpush.bf16.msra.mxu0 0
    %933 = vmatpush.bf16.msra.mxu0 0
    %934 = vmatpush.bf16.msra.mxu0 0
    %935 = vmatpush.bf16.msra.mxu0 %v923
    %936 = vmatpush.bf16.msra.mxu0 %v922
    %937 = vmatpush.bf16.msra.mxu0 %v921
    %938 = vmatpush.bf16.msra.mxu0 %v920
    %939 = vmatmul.bf16.gmra.mxu0 %v929
    %v940 = vpop.f32.mrf.mxu0
    %v941 = vadd.f32 %v902, %v940
    %v942 = vpop.f32.mrf.mxu0
    %v943 = vadd.f32 %v902, %v942
    %944 = vdwg.mxu0
    %v945 = vmax.f32 %v941, 0.0
    %v946 = vmax.f32 %v943, 0.0
    %v947 = vpack.c.bf16 %v946, %v945
    %v948 = vld [vmem:[#allocation4] sm:$0xff]
    %v949 = vld [vmem:[#allocation4 + $0x8] sm:$0xff]
    %v950 = vld [vmem:[#allocation4 + $0x10] sm:$0xff]
    %v951 = vld [vmem:[#allocation4 + $0x18] sm:$0xf]
    %v952 = vld [vmem:[#allocation4 + $0x1c] sm:$0xff]
    %v953 = vld [vmem:[#allocation4 + $0x24] sm:$0xff]
    %v954 = vld [vmem:[#allocation4 + $0x2c] sm:$0xff]
    %v955 = vld [vmem:[#allocation4 + $0x34] sm:$0xf]
    %v956 = vld [vmem:[#allocation4 + $0x38] sm:$0xff]
    %v957 = vld [vmem:[#allocation4 + $0x40] sm:$0xff]
    %v958 = vld [vmem:[#allocation4 + $0x48] sm:$0xff]
    %v959 = vld [vmem:[#allocation4 + $0x50] sm:$0xf]
    %v960 = vld [vmem:[#allocation4 + $0x54] sm:$0xff]
    %v961 = vld [vmem:[#allocation4 + $0x5c] sm:$0xff]
    %v962 = vld [vmem:[#allocation4 + $0x64] sm:$0xff]
    %v963 = vld [vmem:[#allocation4 + $0x6c] sm:$0xf]
    %v964 = vld [vmem:[#allocation4 + $0x70] sm:$0xff]
    %v965 = vld [vmem:[#allocation4 + $0x78] sm:$0xff]
    %v966 = vld [vmem:[#allocation4 + $0x80] sm:$0xff]
    %v967 = vld [vmem:[#allocation4 + $0x88] sm:$0xf]
    %v968 = vld [vmem:[#allocation4 + $0x8c] sm:$0xff]
    %v969 = vld [vmem:[#allocation4 + $0x94] sm:$0xff]
    %v970 = vld [vmem:[#allocation4 + $0x9c] sm:$0xff]
    %v971 = vld [vmem:[#allocation4 + $0xa4] sm:$0xf]
    %v972 = vld [vmem:[#allocation4 + $0xa8] sm:$0xff]
    %v973 = vld [vmem:[#allocation4 + $0xb0] sm:$0xff]
    %v974 = vld [vmem:[#allocation4 + $0xb8] sm:$0xff]
    %v975 = vld [vmem:[#allocation4 + $0xc0] sm:$0xf]
    %v976 = vld [vmem:[#allocation4 + $0xc4] sm:$0xff]
    %v977 = vld [vmem:[#allocation4 + $0xcc] sm:$0xff]
    %v978 = vld [vmem:[#allocation4 + $0xd4] sm:$0xff]
    %v979 = vld [vmem:[#allocation4 + $0xdc] sm:$0xf]
    %v980 = vld [vmem:[#allocation4 + $0xe0] sm:$0xff]
    %v981 = vld [vmem:[#allocation4 + $0xe8] sm:$0xff]
    %v982 = vld [vmem:[#allocation4 + $0xf0] sm:$0xff]
    %v983 = vld [vmem:[#allocation4 + $0xf8] sm:$0xf]
    %v984 = vld [vmem:[#allocation4 + $0xfc] sm:$0xff]
    %v985 = vld [vmem:[#allocation4 + $0x104] sm:$0xff]
    %v986 = vld [vmem:[#allocation4 + $0x10c] sm:$0xff]
    %v987 = vld [vmem:[#allocation4 + $0x114] sm:$0xf]
    %v988 = vld [vmem:[#allocation4 + $0x118] sm:$0xff]
    %v989 = vld [vmem:[#allocation4 + $0x120] sm:$0xff]
    %v990 = vld [vmem:[#allocation4 + $0x128] sm:$0xff]
    %v991 = vld [vmem:[#allocation4 + $0x130] sm:$0xf]
    %v992 = vld [vmem:[#allocation4 + $0x134] sm:$0xff]
    %v993 = vld [vmem:[#allocation4 + $0x13c] sm:$0xff]
    %v994 = vld [vmem:[#allocation4 + $0x144] sm:$0xff]
    %v995 = vld [vmem:[#allocation4 + $0x14c] sm:$0xf]
    %v996 = vld [vmem:[#allocation4 + $0x150] sm:$0xff]
    %v997 = vld [vmem:[#allocation4 + $0x158] sm:$0xff]
    %v998 = vld [vmem:[#allocation4 + $0x160] sm:$0xff]
    %v999 = vld [vmem:[#allocation4 + $0x168] sm:$0xf]
    %v1000 = vld [vmem:[#allocation4 + $0x16c] sm:$0xff]
    %v1001 = vld [vmem:[#allocation4 + $0x174] sm:$0xff]
    %v1002 = vld [vmem:[#allocation4 + $0x17c] sm:$0xff]
    %v1003 = vld [vmem:[#allocation4 + $0x184] sm:$0xf]
    %v1004 = vld [vmem:[#allocation4 + $0x188] sm:$0xff]
    %v1005 = vld [vmem:[#allocation4 + $0x190] sm:$0xff]
    %v1006 = vld [vmem:[#allocation4 + $0x198] sm:$0xff]
    %v1007 = vld [vmem:[#allocation4 + $0x1a0] sm:$0xf]
    %v1008 = vld [vmem:[#allocation4 + $0x1a4] sm:$0xff]
    %v1009 = vld [vmem:[#allocation4 + $0x1ac] sm:$0xff]
    %v1010 = vld [vmem:[#allocation4 + $0x1b4] sm:$0xff]
    %v1011 = vld [vmem:[#allocation4 + $0x1bc] sm:$0xf]
    %v1012 = vld [vmem:[%s14] sm:$0xff]
    %v1014 = vperm.slane %v1012, 0
    %v1015 = vperm.slane %v1012, 1
    %v1016 = vperm.slane %v1012, 2
    %v1017 = vperm.slane %v1012, 3
    %v1018 = vperm.slane %v1012, 4
    %v1019 = vperm.slane %v1012, 5
    %v1020 = vperm.slane %v1012, 6
    %v1092 = vunpack.c.l.b16 %v948
    %v1093 = vunpack.c.h.b16 %v948
    %v1094 = vunpack.c.l.b16 %v949
    %v1095 = vunpack.c.h.b16 %v949
    %v1096 = vunpack.c.l.b16 %v950
    %v1097 = vunpack.c.h.b16 %v950
    %v1098 = vunpack.c.l.b16 %v951
    %v1099 = vunpack.c.l.b16 %v952
    %v1100 = vunpack.c.h.b16 %v952
    %v1101 = vunpack.c.l.b16 %v953
    %v1102 = vunpack.c.h.b16 %v953
    %v1103 = vunpack.c.l.b16 %v954
    %v1104 = vunpack.c.h.b16 %v954
    %v1105 = vunpack.c.l.b16 %v955
    %v1106 = vunpack.c.l.b16 %v956
    %v1107 = vunpack.c.h.b16 %v956
    %v1108 = vunpack.c.l.b16 %v957
    %v1109 = vunpack.c.h.b16 %v957
    %v1110 = vunpack.c.l.b16 %v958
    %v1111 = vunpack.c.h.b16 %v958
    %v1112 = vunpack.c.l.b16 %v959
    %v1113 = vunpack.c.l.b16 %v960
    %v1114 = vunpack.c.h.b16 %v960
    %v1115 = vunpack.c.l.b16 %v961
    %v1116 = vunpack.c.h.b16 %v961
    %v1117 = vunpack.c.l.b16 %v962
    %v1118 = vunpack.c.h.b16 %v962
    %v1119 = vunpack.c.l.b16 %v963
    %v1120 = vunpack.c.l.b16 %v964
    %v1121 = vunpack.c.h.b16 %v964
    %v1122 = vunpack.c.l.b16 %v965
    %v1123 = vunpack.c.h.b16 %v965
    %v1124 = vunpack.c.l.b16 %v966
    %v1125 = vunpack.c.h.b16 %v966
    %v1126 = vunpack.c.l.b16 %v967
    %v1127 = vunpack.c.l.b16 %v968
    %v1128 = vunpack.c.h.b16 %v968
    %v1129 = vunpack.c.l.b16 %v969
    %v1130 = vunpack.c.h.b16 %v969
    %v1131 = vunpack.c.l.b16 %v970
    %v1132 = vunpack.c.h.b16 %v970
    %v1133 = vunpack.c.l.b16 %v971
    %v1134 = vunpack.c.l.b16 %v972
    %v1135 = vunpack.c.h.b16 %v972
    %v1136 = vunpack.c.l.b16 %v973
    %v1137 = vunpack.c.h.b16 %v973
    %v1138 = vunpack.c.l.b16 %v974
    %v1139 = vunpack.c.h.b16 %v974
    %v1140 = vunpack.c.l.b16 %v975
    %v1141 = vunpack.c.l.b16 %v976
    %v1142 = vunpack.c.h.b16 %v976
    %v1143 = vunpack.c.l.b16 %v977
    %v1144 = vunpack.c.h.b16 %v977
    %v1145 = vunpack.c.l.b16 %v978
    %v1146 = vunpack.c.h.b16 %v978
    %v1147 = vunpack.c.l.b16 %v979
    %v1148 = vunpack.c.l.b16 %v980
    %v1149 = vunpack.c.h.b16 %v980
    %v1150 = vunpack.c.l.b16 %v981
    %v1151 = vunpack.c.h.b16 %v981
    %v1152 = vunpack.c.l.b16 %v982
    %v1153 = vunpack.c.h.b16 %v982
    %v1154 = vunpack.c.l.b16 %v983
    %v1155 = vunpack.c.l.b16 %v984
    %v1156 = vunpack.c.h.b16 %v984
    %v1157 = vunpack.c.l.b16 %v985
    %v1158 = vunpack.c.h.b16 %v985
    %v1159 = vunpack.c.l.b16 %v986
    %v1160 = vunpack.c.h.b16 %v986
    %v1161 = vunpack.c.l.b16 %v987
    %v1162 = vunpack.c.l.b16 %v988
    %v1163 = vunpack.c.h.b16 %v988
    %v1164 = vunpack.c.l.b16 %v989
    %v1165 = vunpack.c.h.b16 %v989
    %v1166 = vunpack.c.l.b16 %v990
    %v1167 = vunpack.c.h.b16 %v990
    %v1168 = vunpack.c.l.b16 %v991
    %v1169 = vunpack.c.l.b16 %v992
    %v1170 = vunpack.c.h.b16 %v992
    %v1171 = vunpack.c.l.b16 %v993
    %v1172 = vunpack.c.h.b16 %v993
    %v1173 = vunpack.c.l.b16 %v994
    %v1174 = vunpack.c.h.b16 %v994
    %v1175 = vunpack.c.l.b16 %v995
    %v1176 = vunpack.c.l.b16 %v996
    %v1177 = vunpack.c.h.b16 %v996
    %v1178 = vunpack.c.l.b16 %v997
    %v1179 = vunpack.c.h.b16 %v997
    %v1180 = vunpack.c.l.b16 %v998
    %v1181 = vunpack.c.h.b16 %v998
    %v1182 = vunpack.c.l.b16 %v999
    %v1183 = vunpack.c.l.b16 %v1000
    %v1184 = vunpack.c.h.b16 %v1000
    %v1185 = vunpack.c.l.b16 %v1001
    %v1186 = vunpack.c.h.b16 %v1001
    %v1187 = vunpack.c.l.b16 %v1002
    %v1188 = vunpack.c.h.b16 %v1002
    %v1189 = vunpack.c.l.b16 %v1003
    %v1190 = vunpack.c.l.b16 %v1004
    %v1191 = vunpack.c.h.b16 %v1004
    %v1192 = vunpack.c.l.b16 %v1005
    %v1193 = vunpack.c.h.b16 %v1005
    %v1194 = vunpack.c.l.b16 %v1006
    %v1195 = vunpack.c.h.b16 %v1006
    %v1196 = vunpack.c.l.b16 %v1007
    %v1197 = vunpack.c.l.b16 %v1008
    %v1198 = vunpack.c.h.b16 %v1008
    %v1199 = vunpack.c.l.b16 %v1009
    %v1200 = vunpack.c.h.b16 %v1009
    %v1201 = vunpack.c.l.b16 %v1010
    %v1202 = vunpack.c.h.b16 %v1010
    %v1203 = vunpack.c.l.b16 %v1011
    %v1204 = vpack.c.b16 %v1099, %v1092
    %v1205 = vpack.c.b16 %v1100, %v1093
    %v1206 = vpack.c.b16 %v1101, %v1094
    %v1207 = vpack.c.b16 %v1102, %v1095
    %v1208 = vpack.c.b16 %v1103, %v1096
    %v1209 = vpack.c.b16 %v1104, %v1097
    %v1210 = vpack.c.b16 %v1105, %v1098
    %v1211 = vpack.c.b16 %v1113, %v1106
    %v1212 = vpack.c.b16 %v1114, %v1107
    %v1213 = vpack.c.b16 %v1115, %v1108
    %v1214 = vpack.c.b16 %v1116, %v1109
    %v1215 = vpack.c.b16 %v1117, %v1110
    %v1216 = vpack.c.b16 %v1118, %v1111
    %v1217 = vpack.c.b16 %v1119, %v1112
    %v1218 = vpack.c.b16 %v1127, %v1120
    %v1219 = vpack.c.b16 %v1128, %v1121
    %v1220 = vpack.c.b16 %v1129, %v1122
    %v1221 = vpack.c.b16 %v1130, %v1123
    %v1222 = vpack.c.b16 %v1131, %v1124
    %v1223 = vpack.c.b16 %v1132, %v1125
    %v1224 = vpack.c.b16 %v1133, %v1126
    %v1225 = vpack.c.b16 %v1141, %v1134
    %v1226 = vpack.c.b16 %v1142, %v1135
    %v1227 = vpack.c.b16 %v1143, %v1136
    %v1228 = vpack.c.b16 %v1144, %v1137
    %v1229 = vpack.c.b16 %v1145, %v1138
    %v1230 = vpack.c.b16 %v1146, %v1139
    %v1231 = vpack.c.b16 %v1147, %v1140
    %v1232 = vpack.c.b16 %v1155, %v1148
    %v1233 = vpack.c.b16 %v1156, %v1149
    %v1234 = vpack.c.b16 %v1157, %v1150
    %v1235 = vpack.c.b16 %v1158, %v1151
    %v1236 = vpack.c.b16 %v1159, %v1152
    %v1237 = vpack.c.b16 %v1160, %v1153
    %v1238 = vpack.c.b16 %v1161, %v1154
    %v1239 = vpack.c.b16 %v1169, %v1162
    %v1240 = vpack.c.b16 %v1170, %v1163
    %v1241 = vpack.c.b16 %v1171, %v1164
    %v1242 = vpack.c.b16 %v1172, %v1165
    %v1243 = vpack.c.b16 %v1173, %v1166
    %v1244 = vpack.c.b16 %v1174, %v1167
    %v1245 = vpack.c.b16 %v1175, %v1168
    %v1246 = vpack.c.b16 %v1183, %v1176
    %v1247 = vpack.c.b16 %v1184, %v1177
    %v1248 = vpack.c.b16 %v1185, %v1178
    %v1249 = vpack.c.b16 %v1186, %v1179
    %v1250 = vpack.c.b16 %v1187, %v1180
    %v1251 = vpack.c.b16 %v1188, %v1181
    %v1252 = vpack.c.b16 %v1189, %v1182
    %v1253 = vpack.c.b16 %v1197, %v1190
    %v1254 = vpack.c.b16 %v1198, %v1191
    %v1255 = vpack.c.b16 %v1199, %v1192
    %v1256 = vpack.c.b16 %v1200, %v1193
    %v1257 = vpack.c.b16 %v1201, %v1194
    %v1258 = vpack.c.b16 %v1202, %v1195
    %v1259 = vpack.c.b16 %v1203, %v1196
    %1316 = vmatpush.bf16.msra.mxu0 %v1253
    %1317 = vmatpush.bf16.msra.mxu0 %v1246
    %1318 = vmatpush.bf16.msra.mxu0 %v1239
    %1319 = vmatpush.bf16.msra.mxu0 %v1232
    %1320 = vmatpush.bf16.msra.mxu0 %v1225
    %1321 = vmatpush.bf16.msra.mxu0 %v1218
    %1322 = vmatpush.bf16.msra.mxu0 %v1211
    %1323 = vmatpush.bf16.msra.mxu0 %v1204
    %1324 = vmatmul.bf16.gmra.mxu0 %v947
    %v1325 = vpop.f32.mrf.mxu0
    %v1326 = vadd.f32 %v1014, %v1325
    %v1327 = vpop.f32.mrf.mxu0
    %v1328 = vadd.f32 %v1014, %v1327
    %1329 = vdwg.mxu0
    %1330 = vmatpush.bf16.msra.mxu0 %v1254
    %1331 = vmatpush.bf16.msra.mxu0 %v1247
    %1332 = vmatpush.bf16.msra.mxu0 %v1240
    %1333 = vmatpush.bf16.msra.mxu0 %v1233
    %1334 = vmatpush.bf16.msra.mxu0 %v1226
    %1335 = vmatpush.bf16.msra.mxu0 %v1219
    %1336 = vmatpush.bf16.msra.mxu0 %v1212
    %1337 = vmatpush.bf16.msra.mxu0 %v1205
    %1338 = vmatmul.bf16.gmra.mxu0 %v947
    %v1339 = vpop.f32.mrf.mxu0
    %v1340 = vadd.f32 %v1015, %v1339
    %v1341 = vpop.f32.mrf.mxu0
    %v1342 = vadd.f32 %v1015, %v1341
    %1343 = vdwg.mxu0
    %1344 = vmatpush.bf16.msra.mxu0 %v1255
    %1345 = vmatpush.bf16.msra.mxu0 %v1248
    %1346 = vmatpush.bf16.msra.mxu0 %v1241
    %1347 = vmatpush.bf16.msra.mxu0 %v1234
    %1348 = vmatpush.bf16.msra.mxu0 %v1227
    %1349 = vmatpush.bf16.msra.mxu0 %v1220
    %1350 = vmatpush.bf16.msra.mxu0 %v1213
    %1351 = vmatpush.bf16.msra.mxu0 %v1206
    %1352 = vmatmul.bf16.gmra.mxu0 %v947
    %v1353 = vpop.f32.mrf.mxu0
    %v1354 = vadd.f32 %v1016, %v1353
    %v1355 = vpop.f32.mrf.mxu0
    %v1356 = vadd.f32 %v1016, %v1355
    %1357 = vdwg.mxu0
    %1358 = vmatpush.bf16.msra.mxu0 %v1256
    %1359 = vmatpush.bf16.msra.mxu0 %v1249
    %1360 = vmatpush.bf16.msra.mxu0 %v1242
    %1361 = vmatpush.bf16.msra.mxu0 %v1235
    %1362 = vmatpush.bf16.msra.mxu0 %v1228
    %1363 = vmatpush.bf16.msra.mxu0 %v1221
    %1364 = vmatpush.bf16.msra.mxu0 %v1214
    %1365 = vmatpush.bf16.msra.mxu0 %v1207
    %1366 = vmatmul.bf16.gmra.mxu0 %v947
    %v1367 = vpop.f32.mrf.mxu0
    %v1368 = vadd.f32 %v1017, %v1367
    %v1369 = vpop.f32.mrf.mxu0
    %v1370 = vadd.f32 %v1017, %v1369
    %1371 = vdwg.mxu0
    %1372 = vmatpush.bf16.msra.mxu0 %v1257
    %1373 = vmatpush.bf16.msra.mxu0 %v1250
    %1374 = vmatpush.bf16.msra.mxu0 %v1243
    %1375 = vmatpush.bf16.msra.mxu0 %v1236
    %1376 = vmatpush.bf16.msra.mxu0 %v1229
    %1377 = vmatpush.bf16.msra.mxu0 %v1222
    %1378 = vmatpush.bf16.msra.mxu0 %v1215
    %1379 = vmatpush.bf16.msra.mxu0 %v1208
    %1380 = vmatmul.bf16.gmra.mxu0 %v947
    %v1381 = vpop.f32.mrf.mxu0
    %v1382 = vadd.f32 %v1018, %v1381
    %v1383 = vpop.f32.mrf.mxu0
    %v1384 = vadd.f32 %v1018, %v1383
    %1385 = vdwg.mxu0
    %1386 = vmatpush.bf16.msra.mxu0 %v1258
    %1387 = vmatpush.bf16.msra.mxu0 %v1251
    %1388 = vmatpush.bf16.msra.mxu0 %v1244
    %1389 = vmatpush.bf16.msra.mxu0 %v1237
    %1390 = vmatpush.bf16.msra.mxu0 %v1230
    %1391 = vmatpush.bf16.msra.mxu0 %v1223
    %1392 = vmatpush.bf16.msra.mxu0 %v1216
    %1393 = vmatpush.bf16.msra.mxu0 %v1209
    %1394 = vmatmul.bf16.gmra.mxu0 %v947
    %v1395 = vpop.f32.mrf.mxu0
    %v1396 = vadd.f32 %v1019, %v1395
    %v1397 = vpop.f32.mrf.mxu0
    %v1398 = vadd.f32 %v1019, %v1397
    %1399 = vdwg.mxu0
    %1400 = vmatpush.bf16.msra.mxu0 %v1259
    %1401 = vmatpush.bf16.msra.mxu0 %v1252
    %1402 = vmatpush.bf16.msra.mxu0 %v1245
    %1403 = vmatpush.bf16.msra.mxu0 %v1238
    %1404 = vmatpush.bf16.msra.mxu0 %v1231
    %1405 = vmatpush.bf16.msra.mxu0 %v1224
    %1406 = vmatpush.bf16.msra.mxu0 %v1217
    %1407 = vmatpush.bf16.msra.mxu0 %v1210
    %1408 = vmatmul.bf16.gmra.mxu0 %v947
    %v1409 = vpop.f32.mrf.mxu0
    %v1410 = vadd.f32 %v1020, %v1409
    %v1411 = vpop.f32.mrf.mxu0
    %v1412 = vadd.f32 %v1020, %v1411
    %1413 = vdwg.mxu0
    %v1414 = vtanh.pop %v1326
    %v1415 = vtanh.pop %v1340
    %v1416 = vtanh.pop %v1354
    %v1417 = vtanh.pop %v1368
    %v1418 = vtanh.pop %v1382
    %v1419 = vtanh.pop %v1396
    %v1420 = vtanh.pop %v1410
    %v1421 = vtanh.pop %v1328
    %v1422 = vtanh.pop %v1342
    %v1423 = vtanh.pop %v1356
    %v1424 = vtanh.pop %v1370
    %v1425 = vtanh.pop %v1384
    %v1426 = vtanh.pop %v1398
    %v1427 = vtanh.pop %v1412
    %1428 = vst [vmem:[%s15] sm:$0xff] %v1414
    %1429 = vst [vmem:[%s15 + $0x8] sm:$0xff] %v1415
    %1430 = vst [vmem:[%s15 + $0x10] sm:$0xff] %v1416
    %1431 = vst [vmem:[%s15 + $0x18] sm:$0xff] %v1417
    %1432 = vst [vmem:[%s15 + $0x20] sm:$0xff] %v1418
    %1433 = vst [vmem:[%s15 + $0x28] sm:$0xff] %v1419
    %1434 = vst [vmem:[%s15 + $0x30] sm:$0xff] %v1420
    %1435 = vst [vmem:[%s15 + $0x38] sm:$0xff] %v1421
    %1436 = vst [vmem:[%s15 + $0x40] sm:$0xff] %v1422
    %1437 = vst [vmem:[%s15 + $0x48] sm:$0xff] %v1423
    %1438 = vst [vmem:[%s15 + $0x50] sm:$0xff] %v1424
    %1439 = vst [vmem:[%s15 + $0x58] sm:$0xff] %v1425
    %1440 = vst [vmem:[%s15 + $0x60] sm:$0xff] %v1426
    %1441 = vst [vmem:[%s15 + $0x68] sm:$0xff] %v1427
    // Predicated region
    $region70: #{autoencoder_forward.1} parent=1 // pred_check
      _
    $region71: #{autoencoder_forward.1} parent=1 // pred_check_branch
      %1443 = sbr.rel (0) target = $region73
    $region72: #{autoencoder_forward.1} parent=1 // pred_region
      _
    $region73: #{autoencoder_forward.1} parent=1 // pred_fallthru
      _
    // Predicated region
    $region74: #{autoencoder_forward.1} parent=1 // pred_check
      _
    $region75: #{autoencoder_forward.1} parent=1 // pred_check_branch
      %1445 = sbr.rel (0) target = $region77
    $region76: #{autoencoder_forward.1} parent=1 // pred_region
      _
    $region77: #{autoencoder_forward.1} parent=1 // pred_fallthru
      _
    %1446 = vsyncpa [#allocation3], 1
    %1447 = vsyncpa [#allocation5], 1

</llo_original>
